<compile_context>
chip_gen: v7x
topology: tpu7x:2x2x1
jax: 0.10.0
libtpu: 0.0.40
codegen_flags: <defaults>
</compile_context>

<pallas_src>
import jax
import jax.numpy as jnp
from jax.experimental import pallas as pl
from jax.experimental.pallas import tpu as pltpu

STATE_DIM = 2      # MountainCarContinuous-v0 observation dim
ACTION_DIM = 1     # MountainCarContinuous-v0 action dim
HIDDEN = 128


def _round_up(n, m):
    return ((n + m - 1) // m) * m


# ----------------------------------------------------------------------------
# Pallas kernel: VPU outer-product fc1 + bf16 MXU fc2 + VPU/XLU mu_head.
# ----------------------------------------------------------------------------
def actor_kernel(x_ref, w1_ref, w2_ref, vec_ref, mu_ref):
    # x_ref:   (TB, STATE_DIM)        f32
    # w1_ref:  (STATE_DIM, HIDDEN)    f32   (resident across grid steps)
    # w2_ref:  (HIDDEN, HIDDEN)       bf16  (resident)
    # vec_ref: (4, HIDDEN)            f32   rows: [b1, b2, w3_row, b3_bcast]
    # mu_ref:  (TB, ACTION_DIM)       f32
    x = x_ref[...]                                   # (TB, 2)
    w1 = w1_ref[...]                                 # (2, 128)
    vp = vec_ref[...]                                # (4, 128)
    b1 = vp[0:1, :]                                  # (1, 128)
    b2 = vp[1:2, :]                                  # (1, 128)
    w3r = vp[2:3, :]                                 # (1, 128)  mu_head weight row
    b3 = vp[3:4, 0:1]                                # (1, 1)    mu_head bias

    # fc1: K == 2 -> VPU outer product (f32) beats a padded MXU matmul.
    h1 = jnp.tanh(x[:, 0:1] * w1[0:1, :]
                  + x[:, 1:2] * w1[1:2, :]
                  + b1)                              # (TB, 128)

    # fc2 on the MXU: bf16 operands, f32 accumulation.
    h2 = jnp.tanh(
        jnp.dot(h1.astype(jnp.bfloat16), w2_ref[...],
                preferred_element_type=jnp.float32)
        + b2)                                        # (TB, 128)

    # mu_head (action_dim == 1): VPU multiply + XLU lane reduction.
    # No 128x-padded matmul, no padded writeback.
    mu_ref[...] = jnp.tanh(
        jnp.sum(h2 * w3r, axis=-1, keepdims=True) + b3)   # (TB, 1)


# ----------------------------------------------------------------------------
# One-time parameter preparation (packing / dtype / std) — NOT per call.
# ----------------------------------------------------------------------------
def prepare_actor_params(params):
    w1, b1, w2, b2, w3, b3, log_std = params
    w1_f32 = w1.astype(jnp.float32)                                  # (2, 128)
    w2_bf16 = w2.astype(jnp.bfloat16)                                # (128, 128)
    vec_pack = jnp.stack(
        [b1.astype(jnp.float32),                                     # row 0: b1
         b2.astype(jnp.float32),                                     # row 1: b2
         w3.astype(jnp.float32).reshape(HIDDEN),                     # row 2: mu_head w
         jnp.broadcast_to(b3.astype(jnp.float32), (HIDDEN,))],       # row 3: mu_head b
        axis=0)                                                      # (4, 128)
    std = jnp.exp(log_std)                                           # (ACTION_DIM,)
    return (w1_f32, w2_bf16, vec_pack, std)


def actor_forward(x, prepared, *, tb=512):
    """x: (B, STATE_DIM). Returns (mu: (B, ACTION_DIM), std: (ACTION_DIM,))."""
    w1, w2_bf16, vec_pack, std = prepared
    x = x.astype(jnp.float32)
    B = x.shape[0]

    tb = min(tb, _round_up(B, 8))          # tile rows (multiple of 8 sublanes)
    nb = pl.cdiv(B, tb)
    b_pad = nb * tb
    if b_pad != B:
        x = jnp.pad(x, ((0, b_pad - B), (0, 0)))

    mu_p = pl.pallas_call(
        actor_kernel,
        out_shape=jax.ShapeDtypeStruct((b_pad, ACTION_DIM), jnp.float32),
        grid_spec=pltpu.PrefetchScalarGridSpec(
            num_scalar_prefetch=0,
            grid=(nb,),
            in_specs=[
                pl.BlockSpec((tb, STATE_DIM), lambda i: (i, 0)),       # x tile
                pl.BlockSpec((STATE_DIM, HIDDEN), lambda i: (0, 0)),   # w1 resident
                pl.BlockSpec((HIDDEN, HIDDEN), lambda i: (0, 0)),      # w2 resident
                pl.BlockSpec((4, HIDDEN), lambda i: (0, 0)),           # biases/w3 resident
            ],
            out_specs=pl.BlockSpec((tb, ACTION_DIM), lambda i: (i, 0)),
        ),
        compiler_params=pltpu.CompilerParams(
            dimension_semantics=("parallel",)),   # megacore-shard batch on v7x
    )(x, w1, w2_bf16, vec_pack)

    return mu_p[:B], std


# ----------------------------------------------------------------------------
# Deterministic parameter init (mirrors orthogonal_init in the PyTorch code).
# ----------------------------------------------------------------------------
def orthogonal(key, out_dim, in_dim, gain=1.0):
    """Orthogonal init like nn.init.orthogonal_ for an (out, in) weight,
    returned transposed to (in, out) for the kernel layout."""
    rows, cols = out_dim, in_dim
    a = jax.random.normal(key, (max(rows, cols), min(rows, cols)), jnp.float32)
    q, r = jnp.linalg.qr(a)
    q = q * jnp.sign(jnp.diagonal(r))
    if rows < cols:
        q = q.T
    w_out_in = gain * q[:rows, :cols]
    return w_out_in.T


def init_actor_params(key):
    k1, k2, k3 = jax.random.split(key, 3)
    w1 = orthogonal(k1, HIDDEN, STATE_DIM, gain=1.0)       # (2, 128)
    b1 = jnp.zeros((HIDDEN,), jnp.float32)
    w2 = orthogonal(k2, HIDDEN, HIDDEN, gain=1.0)          # (128, 128)
    b2 = jnp.zeros((HIDDEN,), jnp.float32)
    w3 = orthogonal(k3, ACTION_DIM, HIDDEN, gain=0.01)     # (128, 1)
    b3 = jnp.zeros((ACTION_DIM,), jnp.float32)
    log_std = jnp.zeros((ACTION_DIM,), jnp.float32)
    return (w1, b1, w2, b2, w3, b3, log_std)


def actor_forward_ref(x, params):
    """Plain-JAX f32 reference for correctness checking."""
    w1, b1, w2, b2, w3, b3, log_std = params
    h1 = jnp.tanh(x @ w1 + b1)
    h2 = jnp.tanh(h1 @ w2 + b2)
    mu = jnp.tanh(h2 @ w3 + b3)
    std = jnp.exp(log_std)
    return mu, std


if __name__ == "__main__":
    key = jax.random.PRNGKey(0)
    kp, kx1, kx2 = jax.random.split(key, 3)

    params = init_actor_params(kp)
    prepared = prepare_actor_params(params)     # one-time packing / dtype / std

    fwd = jax.jit(actor_forward)

    # Small batch (typical per-env-step shape, multiple of the f32 sublane).
    x_small = jax.random.normal(kx1, (8, STATE_DIM), jnp.float32)
    mu, std = fwd(x_small, prepared)
    jax.block_until_ready((mu, std))
    mu_ref, std_ref = actor_forward_ref(x_small, params)
    assert mu.shape == (8, ACTION_DIM) and std.shape == (ACTION_DIM,)
    # bf16 fc2 operands => loosened tolerance vs. the f32 reference.
    assert jnp.allclose(mu, mu_ref, atol=1e-3, rtol=0.0), \
        float(jnp.max(jnp.abs(mu - mu_ref)))
    assert jnp.allclose(std, std_ref, atol=1e-6, rtol=1e-6)

    # Larger ragged batch: exercises the batch grid (2 steps) + tail padding.
    x_big = jax.random.normal(kx2, (1000, STATE_DIM), jnp.float32)
    mu2, std2 = fwd(x_big, prepared)
    jax.block_until_ready((mu2, std2))
    mu2_ref, _ = actor_forward_ref(x_big, params)
    assert mu2.shape == (1000, ACTION_DIM)
    assert jnp.allclose(mu2, mu2_ref, atol=1e-3, rtol=0.0), \
        float(jnp.max(jnp.abs(mu2 - mu2_ref)))

    print("KERNEL_OK")
</pallas_src>

<mosaic_0001>
module attributes {stable_mosaic.version = 11 : i64} {
  func.func @actor_kernel(%arg0: i32, %arg1: memref<8x2xf32, #tpu.memory_space<vmem>>, %arg2: memref<2x128xf32, #tpu.memory_space<vmem>>, %arg3: memref<128x128xbf16, #tpu.memory_space<vmem>>, %arg4: memref<4x128xf32, #tpu.memory_space<vmem>>, %arg5: memref<8x1xf32, #tpu.memory_space<vmem>>) attributes {dimension_semantics = [#tpu.dimension_semantics<parallel>], iteration_bounds = array<i64: 1>, scalar_prefetch = 0 : i64, scratch_operands = 0 : i64, tpu.core_type = #tpu.core_type<tc>, window_params = [{transform_indices = @transform_0, window_bounds = array<i64: 8, 2>}, {pipeline_mode = #tpu.pipeline_mode<synchronous>, transform_indices = @transform_1, window_bounds = array<i64: 2, 128>}, {pipeline_mode = #tpu.pipeline_mode<synchronous>, transform_indices = @transform_2, window_bounds = array<i64: 128, 128>}, {pipeline_mode = #tpu.pipeline_mode<synchronous>, transform_indices = @transform_3, window_bounds = array<i64: 4, 128>}, {transform_indices = @transform_4, window_bounds = array<i64: 8, 1>}]} {
    %c0 = arith.constant 0 : index
    %c0_0 = arith.constant 0 : index
    %0 = vector.load %arg1[%c0, %c0_0] : memref<8x2xf32, #tpu.memory_space<vmem>>, vector<8x2xf32>
    %c0_1 = arith.constant 0 : index
    %c0_2 = arith.constant 0 : index
    %1 = vector.load %arg2[%c0_1, %c0_2] : memref<2x128xf32, #tpu.memory_space<vmem>>, vector<2x128xf32>
    %c0_3 = arith.constant 0 : index
    %c0_4 = arith.constant 0 : index
    %2 = vector.load %arg4[%c0_3, %c0_4] : memref<4x128xf32, #tpu.memory_space<vmem>>, vector<4x128xf32>
    %3 = vector.extract_strided_slice %2 {offsets = [0, 0], sizes = [1, 128], strides = [1, 1]} : vector<4x128xf32> to vector<1x128xf32>
    %4 = vector.extract_strided_slice %2 {offsets = [1, 0], sizes = [1, 128], strides = [1, 1]} : vector<4x128xf32> to vector<1x128xf32>
    %5 = vector.extract_strided_slice %2 {offsets = [2, 0], sizes = [1, 128], strides = [1, 1]} : vector<4x128xf32> to vector<1x128xf32>
    %6 = vector.extract_strided_slice %2 {offsets = [3, 0], sizes = [1, 1], strides = [1, 1]} : vector<4x128xf32> to vector<1x1xf32>
    %7 = vector.extract_strided_slice %0 {offsets = [0, 0], sizes = [8, 1], strides = [1, 1]} : vector<8x2xf32> to vector<8x1xf32>
    %8 = vector.extract_strided_slice %1 {offsets = [0, 0], sizes = [1, 128], strides = [1, 1]} : vector<2x128xf32> to vector<1x128xf32>
    %9 = vector.broadcast %7 : vector<8x1xf32> to vector<8x128xf32>
    %10 = vector.broadcast %8 : vector<1x128xf32> to vector<8x128xf32>
    %11 = arith.mulf %9, %10 : vector<8x128xf32>
    %12 = vector.extract_strided_slice %0 {offsets = [0, 1], sizes = [8, 1], strides = [1, 1]} : vector<8x2xf32> to vector<8x1xf32>
    %13 = vector.extract_strided_slice %1 {offsets = [1, 0], sizes = [1, 128], strides = [1, 1]} : vector<2x128xf32> to vector<1x128xf32>
    %14 = vector.broadcast %12 : vector<8x1xf32> to vector<8x128xf32>
    %15 = vector.broadcast %13 : vector<1x128xf32> to vector<8x128xf32>
    %16 = arith.mulf %14, %15 : vector<8x128xf32>
    %17 = arith.addf %11, %16 : vector<8x128xf32>
    %18 = vector.broadcast %3 : vector<1x128xf32> to vector<8x128xf32>
    %19 = arith.addf %17, %18 : vector<8x128xf32>
    %20 = math.tanh %19 : vector<8x128xf32>
    %21 = arith.truncf %20 : vector<8x128xf32> to vector<8x128xbf16>
    %c0_5 = arith.constant 0 : index
    %c0_6 = arith.constant 0 : index
    %22 = vector.load %arg3[%c0_5, %c0_6] : memref<128x128xbf16, #tpu.memory_space<vmem>>, vector<128x128xbf16>
    %cst = arith.constant dense<0.000000e+00> : vector<8x128xf32>
    %23 = tpu.matmul %21, %22, %cst {dimension_numbers = #tpu.dot_dimension_numbers<[1], [0], [0], [1], [0, 0, 1, 1], [], []>} : vector<8x128xbf16>, vector<128x128xbf16>, vector<8x128xf32> -> vector<8x128xf32>
    %24 = vector.broadcast %4 : vector<1x128xf32> to vector<8x128xf32>
    %25 = arith.addf %23, %24 : vector<8x128xf32>
    %26 = math.tanh %25 : vector<8x128xf32>
    %27 = vector.broadcast %5 : vector<1x128xf32> to vector<8x128xf32>
    %28 = arith.mulf %26, %27 : vector<8x128xf32>
    %cst_7 = arith.constant dense<0.000000e+00> : vector<8xf32>
    %29 = vector.multi_reduction <add>, %28, %cst_7 [1] : vector<8x128xf32> to vector<8xf32>
    %30 = vector.shape_cast %29 : vector<8xf32> to vector<8x1xf32>
    %31 = vector.broadcast %6 : vector<1x1xf32> to vector<8x1xf32>
    %32 = arith.addf %30, %31 : vector<8x1xf32>
    %33 = math.tanh %32 : vector<8x1xf32>
    %c0_8 = arith.constant 0 : index
    %c0_9 = arith.constant 0 : index
    %34 = vector.load %arg5[%c0_8, %c0_9] : memref<8x1xf32, #tpu.memory_space<vmem>>, vector<8x1xf32>
    tpu.vector_store %arg5[%c0_8, %c0_9], %33 {strides = array<i32>} : memref<8x1xf32, #tpu.memory_space<vmem>>, vector<8x1xf32>,
    return
  }
  func.func @transform_0(%arg0: i32) -> (i32, i32) {
    %c0_i32 = arith.constant 0 : i32
    %c0_i32_0 = arith.constant 0 : i32
    return %arg0, %c0_i32 : i32, i32
  }
  func.func @transform_1(%arg0: i32) -> (i32, i32) {
    %c0_i32 = arith.constant 0 : i32
    %c0_i32_0 = arith.constant 0 : i32
    %c0_i32_1 = arith.constant 0 : i32
    return %c0_i32, %c0_i32_0 : i32, i32
  }
  func.func @transform_2(%arg0: i32) -> (i32, i32) {
    %c0_i32 = arith.constant 0 : i32
    %c0_i32_0 = arith.constant 0 : i32
    %c0_i32_1 = arith.constant 0 : i32
    return %c0_i32, %c0_i32_0 : i32, i32
  }
  func.func @transform_3(%arg0: i32) -> (i32, i32) {
    %c0_i32 = arith.constant 0 : i32
    %c0_i32_0 = arith.constant 0 : i32
    %c0_i32_1 = arith.constant 0 : i32
    return %c0_i32, %c0_i32_0 : i32, i32
  }
  func.func @transform_4(%arg0: i32) -> (i32, i32) {
    %c0_i32 = arith.constant 0 : i32
    %c0_i32_0 = arith.constant 0 : i32
    return %arg0, %c0_i32 : i32, i32
  }
}

</mosaic_0001>

<llo_original>
// kernel: actor_forward.1
$region0: #{actor_forward.1}
  #allocation0 [shape = 'u32[]', space=smem, size = 0x4, offset = 0x4, fixed_abs, tag = 'smem constant byte address 0x4 - core index']
  #allocation1 [shape = 'u32[144,128]{1,0:T(1,128)}', space=vmem, size = 0x12000, scoped, tag = 'internal scratch']
  %s0 = inlined_call_operand.vmem [shape: f32[8,2], index: 0, kind: input, shape index: {}]
  %s1 = inlined_call_operand.vmem [shape: f32[2,128], index: 1, kind: input, shape index: {}]
  %s2 = inlined_call_operand.hbm [shape: bf16[128,128], index: 2, kind: input, shape index: {}]
  %s3 = inlined_call_operand.vmem [shape: f32[4,128], index: 3, kind: input, shape index: {}]
  %s4 = inlined_call_operand.vmem [shape: f32[8,1], index: 4, kind: output, shape index: {}]
  %s5 = sld [smem:[#allocation0]]
  $region30: #{actor_forward.1} parent=0
    _
  %s7 = ssub.s32 1, %s5
  %s8 = scalar_select 0, %s7, %s5
  $region1: #{actor_forward.1} parent=0
    #allocation2 [shape = 'u8[32768]{0}', space=vmem, size = 0x8000, scoped, tag = 'input window, operand 2, single buffered']
    #allocation3 [shape = 's32[1]{0}', space=sflag, size = 0x4, scoped, tag = 'scoped memory for actor_forward.1']
    %9 = vsyncpa [#allocation3], 0
    // Predicated region
    $region2: #{actor_forward.1} parent=1 // pred_check
      _
    $region3: #{actor_forward.1} parent=1 // pred_check_branch
      %11 = sbr.rel (0) target = $region5
    $region4: #{actor_forward.1} parent=1 // pred_region
      _
    $region5: #{actor_forward.1} parent=1 // pred_fallthru
      _
    // Predicated region
    $region6: #{actor_forward.1} parent=1 // pred_check
      _
    $region7: #{actor_forward.1} parent=1 // pred_check_branch
      %13 = sbr.rel (0) target = $region9
    $region8: #{actor_forward.1} parent=1 // pred_region
      _
    $region9: #{actor_forward.1} parent=1 // pred_fallthru
      _
    // Predicated region
    $region10: #{actor_forward.1} parent=1 // pred_check
      _
    $region11: #{actor_forward.1} parent=1 // pred_check_branch
      %15 = sbr.rel (0) target = $region13
    $region12: #{actor_forward.1} parent=1 // pred_region
      %s17 = ssub.s32 1024, 1024
      %18 = vsyncadd [#allocation3], %s17
      %s19 = sshll.u32 [#allocation2], 4
      %s20 = int_to_ptr.vmem [resolvable:$true] %s19
      %25 = dma.hbm_to_vmem [thread:$0]  %s2, 1024, %s20, [#allocation3], 64, 64, 4
    $region13: #{actor_forward.1} parent=1 // pred_fallthru
      _
    // Predicated region
    $region14: #{actor_forward.1} parent=1 // pred_check
      _
    $region15: #{actor_forward.1} parent=1 // pred_check_branch
      %27 = sbr.rel (0) target = $region17
    $region16: #{actor_forward.1} parent=1 // pred_region
      _
    $region17: #{actor_forward.1} parent=1 // pred_fallthru
      _
    // Predicated region
    $region18: #{actor_forward.1} parent=1 // pred_check
      _
    $region19: #{actor_forward.1} parent=1 // pred_check_branch
      %29 = sbr.rel (0) target = $region21
    $region20: #{actor_forward.1} parent=1 // pred_region
      %30 = dma.done [#allocation3], 1024
    $region21: #{actor_forward.1} parent=1 // pred_fallthru
      _
    %v32 = vld [vmem:[%s0] sm:$0xff]
    %v33 = vld [vmem:[%s1] sm:$0x3]
    %v34 = vld [vmem:[%s3] sm:$0xf]
    %36 = vset.pattern.permute.xlu0 0
    %37 = vperm.xlu0 %36, %v32
    %v38 = vpop.permute.xlu0 %37
    %v40 = vlaneseq
    %v41 = vshrl.u32 %v40, 7
    %v42 = vsub.s32 0, %v41
    %v43 = vrot.slane %v33, %v42
    %v44 = vmul.f32 %v38, %v43
    %45 = vset.pattern.permute.xlu0 1
    %46 = vperm.xlu0 %45, %v32
    %v47 = vpop.permute.xlu0 %46
    %v49 = vlaneseq
    %v50 = vshrl.u32 %v49, 7
    %v51 = vsub.s32 1, %v50
    %v52 = vrot.slane %v33, %v51
    %v53 = vmul.f32 %v47, %v52
    %v54 = vadd.f32 %v44, %v53
    %v55 = vlaneseq
    %v56 = vshrl.u32 %v55, 7
    %v57 = vsub.s32 0, %v56
    %v58 = vrot.slane %v34, %v57
    %v59 = vadd.f32 %v54, %v58
    %v60 = vtanh.pop %v59
    %v61 = vpack.c.bf16 %v60, %v60
    %v62 = vld [vmem:[#allocation2] sm:$0xf]
    %v63 = vld [vmem:[#allocation2 + $0x4] sm:$0xf]
    %v64 = vld [vmem:[#allocation2 + $0x8] sm:$0xf]
    %v65 = vld [vmem:[#allocation2 + $0xc] sm:$0xf]
    %v66 = vld [vmem:[#allocation2 + $0x10] sm:$0xf]
    %v67 = vld [vmem:[#allocation2 + $0x14] sm:$0xf]
    %v68 = vld [vmem:[#allocation2 + $0x18] sm:$0xf]
    %v69 = vld [vmem:[#allocation2 + $0x1c] sm:$0xf]
    %v70 = vld [vmem:[#allocation2 + $0x20] sm:$0xf]
    %v71 = vld [vmem:[#allocation2 + $0x24] sm:$0xf]
    %v72 = vld [vmem:[#allocation2 + $0x28] sm:$0xf]
    %v73 = vld [vmem:[#allocation2 + $0x2c] sm:$0xf]
    %v74 = vld [vmem:[#allocation2 + $0x30] sm:$0xf]
    %v75 = vld [vmem:[#allocation2 + $0x34] sm:$0xf]
    %v76 = vld [vmem:[#allocation2 + $0x38] sm:$0xf]
    %v77 = vld [vmem:[#allocation2 + $0x3c] sm:$0xf]
    %v78 = vlaneseq
    %v79 = vshrl.u32 %v78, 7
    %v80 = vsub.s32 1, %v79
    %v81 = vrot.slane %v34, %v80
    %v98 = vunpack.c.l.b16 %v62
    %v99 = vunpack.c.l.b16 %v63
    %v100 = vunpack.c.l.b16 %v64
    %v101 = vunpack.c.l.b16 %v65
    %v102 = vunpack.c.l.b16 %v66
    %v103 = vunpack.c.l.b16 %v67
    %v104 = vunpack.c.l.b16 %v68
    %v105 = vunpack.c.l.b16 %v69
    %v106 = vunpack.c.l.b16 %v70
    %v107 = vunpack.c.l.b16 %v71
    %v108 = vunpack.c.l.b16 %v72
    %v109 = vunpack.c.l.b16 %v73
    %v110 = vunpack.c.l.b16 %v74
    %v111 = vunpack.c.l.b16 %v75
    %v112 = vunpack.c.l.b16 %v76
    %v113 = vunpack.c.l.b16 %v77
    %v114 = vpack.c.b16 %v99, %v98
    %v115 = vpack.c.b16 %v101, %v100
    %v116 = vpack.c.b16 %v103, %v102
    %v117 = vpack.c.b16 %v105, %v104
    %v118 = vpack.c.b16 %v107, %v106
    %v119 = vpack.c.b16 %v109, %v108
    %v120 = vpack.c.b16 %v111, %v110
    %v121 = vpack.c.b16 %v113, %v112
    %130 = vmatprep.subr.bf16.mxu0 0
    %131 = vmatpush1.bf16.msra.mxu0 %v114
    %132 = vmatprep.subr.bf16.mxu0 0
    %133 = vmatpush1.bf16.msra.mxu0 %v115
    %134 = vmatprep.subr.bf16.mxu0 0
    %135 = vmatpush1.bf16.msra.mxu0 %v116
    %136 = vmatprep.subr.bf16.mxu0 0
    %137 = vmatpush1.bf16.msra.mxu0 %v117
    %138 = vmatprep.subr.bf16.mxu0 0
    %139 = vmatpush1.bf16.msra.mxu0 %v118
    %140 = vmatprep.subr.bf16.mxu0 0
    %141 = vmatpush1.bf16.msra.mxu0 %v119
    %142 = vmatprep.subr.bf16.mxu0 0
    %143 = vmatpush1.bf16.msra.mxu0 %v120
    %144 = vmatprep.subr.bf16.mxu0 0
    %145 = vmatpush1.bf16.msra.mxu0 %v121
    %146 = vmatprep.subr.bf16.mxu0 0
    %147 = vmatpush1.bf16.msra.mxu0 0
    %148 = vmatprep.subr.bf16.mxu0 0
    %149 = vmatpush1.bf16.msra.mxu0 0
    %150 = vmatprep.subr.bf16.mxu0 0
    %151 = vmatpush1.bf16.msra.mxu0 0
    %152 = vmatprep.subr.bf16.mxu0 0
    %153 = vmatpush1.bf16.msra.mxu0 0
    %154 = vmatprep.subr.bf16.mxu0 0
    %155 = vmatpush1.bf16.msra.mxu0 0
    %156 = vmatprep.subr.bf16.mxu0 0
    %157 = vmatpush1.bf16.msra.mxu0 0
    %158 = vmatprep.subr.bf16.mxu0 0
    %159 = vmatpush1.bf16.msra.mxu0 0
    %160 = vmatprep.subr.bf16.mxu0 0
    %161 = vmatpush1.bf16.msra.mxu0 0
    %162 = vmatprep.mubr.bf16.mxu0 0
    %163 = vmatmul.mubr.bf16.gmra.mrb[0].mxu0 %v61
    %v164 = vpop.f32.mrb[0].mxu0
    %v165 = vadd.f32 %v81, %v164
    %v166 = vpop.f32.mrb[0].mxu0
    %v167 = vpop.f32.mrb[0].mxu0
    %v168 = vpop.f32.mrb[0].mxu0
    %169 = vdwg.mxu0
    %v170 = vtanh.pop %v165
    %v171 = vlaneseq
    %v172 = vshrl.u32 %v171, 7
    %v173 = vsub.s32 2, %v172
    %v174 = vrot.slane %v34, %v173
    %v175 = vmul.f32 %v170, %v174
    %176 = vadd.xlane.f32.xlu0 %v175
    %v177 = vpop.xlane.xlu0 %176
    %v178 = vlaneseq
    %v179 = vshrl.u32 %v178, 7
    %v180 = vsub.s32 3, %v179
    %v181 = vrot.slane %v34, %v180
    %v182 = vadd.f32 %v177, %v181
    %v183 = vtanh.pop %v182
    %vm184 = vcmask 7168
    %185 = vst.msk [vmem:[%s4] sm:$0xff] %vm184, %v183
    // Predicated region
    $region22: #{actor_forward.1} parent=1 // pred_check
      _
    $region23: #{actor_forward.1} parent=1 // pred_check_branch
      %187 = sbr.rel (0) target = $region25
    $region24: #{actor_forward.1} parent=1 // pred_region
      _
    $region25: #{actor_forward.1} parent=1 // pred_fallthru
      _
    // Predicated region
    $region26: #{actor_forward.1} parent=1 // pred_check
      _
    $region27: #{actor_forward.1} parent=1 // pred_check_branch
      %189 = sbr.rel (0) target = $region29
    $region28: #{actor_forward.1} parent=1 // pred_region
      _
    $region29: #{actor_forward.1} parent=1 // pred_fallthru
      _
    %190 = vsyncpa [#allocation3], 1

</llo_original>
